<compile_context>
chip_gen: v7x
topology: tpu7x:2x2x1
jax: 0.10.0
libtpu: 0.0.40
codegen_flags: <defaults>
</compile_context>

<pallas_src>
import jax
import jax.numpy as jnp
from jax import lax
from jax.experimental import pallas as pl
from jax.experimental.pallas import tpu as pltpu

NEG = -1e30  # finite stand-in for -inf inside the log-space DP (avoids inf-inf NaNs)


def _round_up(x, m):
    return ((x + m - 1) // m) * m


def _physical_vmem_bytes():
    # v5e / v6e: 128 MiB per TensorCore, v7x: 64 MiB.  Query when possible.
    try:
        cap = int(pltpu.get_tpu_info().vmem_capacity_bytes)
        if cap > 0:
            return cap
    except Exception:
        pass
    return 64 * 1024 * 1024  # conservative (v7x per-TC budget)


def _vmem_limit(est_bytes):
    phys = _physical_vmem_bytes()
    return int(min(max(2 * est_bytes, 16 * 1024 * 1024), phys - 8 * 1024 * 1024))


# ==========================================================================
# Fused masked reductions: mel L1 sum + attention-binarization log-sum / hard-sum.
# Grid: (B "parallel", T_mel tiles "arbitrary").  Per-batch lane-dense partial
# sums (B, 8, 128) accumulate in the resident VMEM output block; the tiny final
# reduction over B happens in JAX.
# ==========================================================================
def fused_masked_sums(mel_pred, mels, attn_hard, attn_soft, mel_lengths):
    B, T_mel, n_mels = mel_pred.shape
    T_in = attn_hard.shape[-1]

    hard = attn_hard[:, 0]                       # (B, T_mel, T_in)
    soft = attn_soft[:, 0]
    ml = mel_lengths.astype(jnp.int32)

    # Time tile: as large as comfortably fits VMEM (per-grid-step overhead ~0.35us).
    bytes_per_t = 2 * ((mel_pred.dtype.itemsize + mels.dtype.itemsize) * n_mels
                       + (hard.dtype.itemsize + soft.dtype.itemsize) * T_in)
    tt_cap = max(8, (8 * 1024 * 1024) // max(bytes_per_t, 1))
    if T_mel <= min(1024, tt_cap):
        TT = T_mel
    else:
        TT = max(8, (min(1024, tt_cap) // 8) * 8)
    nT = pl.cdiv(T_mel, TT)

    def kernel(mp_ref, m_ref, h_ref, s_ref, ml_ref, o_ref):
        b = pl.program_id(0)
        t = pl.program_id(1)

        @pl.when(t == 0)
        def _init():
            o_ref[...] = jnp.zeros_like(o_ref)

        t0 = t * TT
        mel_len = jnp.minimum(ml_ref[b], T_mel)

        # ---- mel masked L1 (garbage rows of a partial last tile are masked) ----
        pred = mp_ref[0].astype(jnp.float32)
        tgt = m_ref[0].astype(jnp.float32)
        t_idx = t0 + lax.broadcasted_iota(jnp.int32, (TT, n_mels), 0)
        mel_part = jnp.sum(jnp.where(t_idx < mel_len, jnp.abs(pred - tgt), 0.0))

        # ---- attention binarization ----
        # attn_hard is one-hot (or all-zero) per mel frame, so the selected soft
        # prob is sum(hard*soft) and log() runs on a (TT, 1) vector.
        # The torch reference sums over the whole tensor (no length masking),
        # so only the tile-validity mask (t < T_mel) is applied.
        hard_t = h_ref[0].astype(jnp.float32)
        soft_t = s_ref[0].astype(jnp.float32)
        row_sum = jnp.sum(hard_t, axis=1, keepdims=True)            # (TT, 1)
        p_sel = jnp.sum(hard_t * soft_t, axis=1, keepdims=True)     # (TT, 1)
        t_row = t0 + lax.broadcasted_iota(jnp.int32, (TT, 1), 0)
        valid_row = t_row < T_mel
        sel = jnp.logical_and(valid_row, row_sum > 0.5)
        log_part = jnp.sum(jnp.where(sel, jnp.log(jnp.maximum(p_sel, 1e-12)), 0.0))
        hard_part = jnp.sum(jnp.where(valid_row, row_sum, 0.0))

        # lane-dense partial-sum tile: row 0, lanes {0: mel, 1: bin-log, 2: hard}
        lane = lax.broadcasted_iota(jnp.int32, (8, 128), 1)
        r0 = lax.broadcasted_iota(jnp.int32, (8, 128), 0) == 0
        contrib = jnp.where(jnp.logical_and(r0, lane == 0), mel_part, 0.0)
        contrib = contrib + jnp.where(jnp.logical_and(r0, lane == 1), log_part, 0.0)
        contrib = contrib + jnp.where(jnp.logical_and(r0, lane == 2), hard_part, 0.0)
        o_ref[...] += contrib[None]

    est = TT * bytes_per_t + 2 * 1024 * 1024
    out = pl.pallas_call(
        kernel,
        out_shape=jax.ShapeDtypeStruct((B, 8, 128), jnp.float32),
        grid=(B, nT),
        in_specs=[
            pl.BlockSpec((1, TT, n_mels), lambda b, t: (b, t, 0)),
            pl.BlockSpec((1, TT, n_mels), lambda b, t: (b, t, 0)),
            pl.BlockSpec((1, TT, T_in), lambda b, t: (b, t, 0)),
            pl.BlockSpec((1, TT, T_in), lambda b, t: (b, t, 0)),
            pl.BlockSpec(memory_space=pltpu.SMEM),        # mel_lengths (B,)
        ],
        out_specs=pl.BlockSpec((1, 8, 128), lambda b, t: (b, 0, 0)),
        compiler_params=pltpu.CompilerParams(
            dimension_semantics=("parallel", "arbitrary"),
            vmem_limit_bytes=_vmem_limit(est)),
    )(mel_pred, mels, hard, soft, ml)

    sums = jnp.sum(out[:, 0, :3], axis=0)
    return sums[0], sums[1], sums[2]           # mel_sum, bin_log_sum, hard_sum


# ==========================================================================
# AttentionCTCLoss: per-sample CTC forward.  Targets are [1..K_b] (all distinct),
# blank = 0.  Two-array DP: blank-state alphas and label-state alphas, both on
# lanes 0..T_in, SUB samples on sublanes, T_mel chunked through the grid with the
# alphas carried in VMEM scratch.
# ==========================================================================
def attention_ctc_loss(attn_logprob, in_lens, out_lens, blank_logprob=-1.0):
    B, _, T_mel, T_in = attn_logprob.shape

    SUB = 16 if B >= 32 else 8                 # samples per grid step (sublanes)
    n_blk = pl.cdiv(B, SUB)
    B_pad = n_blk * SUB

    LW = max(128, _round_up(T_in + 1, 128))    # DP lane width; lane T_in = blank lp
    TC = min(T_mel, 256)                       # time chunk (per-chunk VMEM footprint)
    n_chunks = pl.cdiv(T_mel, TC)

    # Time-major layout so SUB samples land on sublanes during the DP.  The host
    # transpose is one extra HBM pass; keeping attn batch-major would instead put a
    # sublane-strided read on the serial DP critical path.
    attn = attn_logprob[:, 0]                               # (B, T_mel, T_in)
    attn_t = jnp.transpose(attn, (1, 0, 2))                 # (T_mel, B, T_in)
    kl = jnp.clip(in_lens.astype(jnp.int32), 1, T_in)
    ql = jnp.minimum(out_lens.astype(jnp.int32), T_mel)
    if B_pad != B:
        attn_t = jnp.pad(attn_t, ((0, 0), (0, B_pad - B), (0, 0)))
        kl = jnp.pad(kl, (0, B_pad - B), constant_values=1)
        ql = jnp.pad(ql, (0, B_pad - B), constant_values=1)
    kl2 = kl.reshape(B_pad, 1)
    ql2 = ql.reshape(B_pad, 1)

    def kernel(ql_sm_ref, kl_ref, ql_ref, attn_ref, o_ref, lab_ref, ab_ref, al_ref):
        blk = pl.program_id(0)
        c = pl.program_id(1)
        t0 = c * TC

        kl_vec = kl_ref[...]                   # (SUB, 1) int32
        ql_vec = ql_ref[...]                   # (SUB, 1) int32
        lane = lax.broadcasted_iota(jnp.int32, (SUB, LW), 1)

        # alpha init: virtual t = -1 state; one recursion step yields alpha_0
        @pl.when(c == 0)
        def _init():
            ab_ref[...] = jnp.where(lane == 0, 0.0, NEG)
            al_ref[...] = jnp.full((SUB, LW), NEG, jnp.float32)

        # per-block max mel length -> skip fully-padded chunks / bound the DP
        base = blk * SUB
        t_max = ql_sm_ref[base]
        for i in range(1, SUB):
            t_max = jnp.maximum(t_max, ql_sm_ref[base + i])

        @pl.when(t0 < t_max)
        def _chunk():
            # ---- masked log-softmax over {blank} U {labels 1..kl_b} ------------
            x = attn_ref[...].astype(jnp.float32)            # (TC, SUB, T_in)
            cls = lax.broadcasted_iota(jnp.int32, (1, SUB, T_in), 2)
            xm = jnp.where(cls < kl_vec.reshape(1, SUB, 1), x, NEG)
            m = jnp.maximum(jnp.max(xm, axis=2, keepdims=True), blank_logprob)
            denom = (jnp.sum(jnp.exp(xm - m), axis=2, keepdims=True)
                     + jnp.exp(blank_logprob - m))
            logz = m + jnp.log(denom)                        # (TC, SUB, 1)
            lab_ref[:, :, :T_in] = xm - logz                 # label log-probs
            lab_ref[:, :, T_in:T_in + 1] = blank_logprob - logz  # blank log-prob
            # lanes > T_in of lab_ref stay uninitialized; every use below is
            # masked by `lane < kl` before it can reach the alphas.

            # ---- alpha recursion over this chunk (serial, EUP-bound) -----------
            n_steps = jnp.minimum(t_max - t0, TC)

            def body(tt, carry):
                ab, al, row = carry
                nxt = lab_ref[jnp.minimum(tt + 1, TC - 1)]   # prefetch next row
                lpb = row[:, T_in:T_in + 1]                  # (SUB, 1) blank lp
                al_shift = jnp.where(lane >= 1,
                                     pltpu.roll(al, shift=1, axis=1), NEG)
                # shared-max logsumexp for both updates (5 EUP ops / elem / step)
                mm = jnp.maximum(jnp.maximum(al, ab), al_shift)
                e_ab = jnp.exp(ab - mm)
                e_as = jnp.exp(al_shift - mm)
                e_al = jnp.exp(al - mm)
                new_ab = mm + jnp.log(e_ab + e_as) + lpb            # blank states
                new_al = mm + jnp.log(e_al + e_ab + e_as) + row     # label states
                new_ab = jnp.where(lane <= kl_vec, new_ab, NEG)
                new_al = jnp.where(lane < kl_vec, new_al, NEG)
                upd = (t0 + tt) < ql_vec                     # per-sample freeze
                ab = jnp.where(upd, new_ab, ab)
                al = jnp.where(upd, new_al, al)
                return ab, al, nxt

            ab_f, al_f, _ = lax.fori_loop(
                0, n_steps, body, (ab_ref[...], al_ref[...], lab_ref[0]))
            ab_ref[...] = ab_f
            al_ref[...] = al_f

        # ---- finalize on the last chunk ---------------------------------------
        @pl.when(c == n_chunks - 1)
        def _fin():
            ab = ab_ref[...]
            al = al_ref[...]
            fb = jnp.where(lane == kl_vec, ab, NEG)          # final blank (s=2K)
            fl = jnp.where(lane == kl_vec - 1, al, NEG)      # final label (s=2K-1)
            mf = jnp.maximum(jnp.max(fb, axis=1, keepdims=True),
                             jnp.max(fl, axis=1, keepdims=True))
            ll = mf + jnp.log(jnp.sum(jnp.exp(fb - mf), axis=1, keepdims=True)
                              + jnp.sum(jnp.exp(fl - mf), axis=1, keepdims=True))
            # CTCLoss(reduction='mean', N=1): divide by target length;
            # zero_infinity=True -> impossible alignments contribute 0.
            loss = jnp.where(ll < 0.5 * NEG, 0.0, -ll / kl_vec.astype(jnp.float32))
            o_ref[...] = jnp.broadcast_to(loss, (SUB, 128))

    est = (2 * TC * SUB * T_in * attn_t.dtype.itemsize    # double-buffered attn chunk
           + TC * SUB * LW * 4                            # per-chunk lab scratch
           + 8 * SUB * LW * 4                             # alphas + loop temps
           + 2 * 1024 * 1024)

    per = pl.pallas_call(
        kernel,
        out_shape=jax.ShapeDtypeStruct((B_pad, 128), jnp.float32),
        grid=(n_blk, n_chunks),
        in_specs=[
            pl.BlockSpec(memory_space=pltpu.SMEM),                   # ql scalars
            pl.BlockSpec((SUB, 1), lambda g, c: (g, 0)),             # key lens
            pl.BlockSpec((SUB, 1), lambda g, c: (g, 0)),             # query lens
            pl.BlockSpec((TC, SUB, T_in), lambda g, c: (c, g, 0)),   # attn chunk
        ],
        out_specs=pl.BlockSpec((SUB, 128), lambda g, c: (g, 0)),
        scratch_shapes=[
            pltpu.VMEM((TC, SUB, LW), jnp.float32),    # per-chunk ext log-probs
            pltpu.VMEM((SUB, LW), jnp.float32),        # alpha: blank states
            pltpu.VMEM((SUB, LW), jnp.float32),        # alpha: label states
        ],
        compiler_params=pltpu.CompilerParams(
            dimension_semantics=("parallel", "arbitrary"),  # batch blocks -> 2 TCs
            vmem_limit_bytes=_vmem_limit(est)),
    )(ql, kl2, ql2, attn_t)

    return jnp.mean(per[:B, 0])


# ==========================================================================
# AcousticModelLoss.forward
# ==========================================================================
def acoustic_model_loss(model_output, batch, *, use_mel_loss=True,
                        mel_scale=1.0, dur_scale=1.0, pitch_scale=1.0,
                        align_scale=1.0):
    (mel_pred, log_dur_pred, pitch_pred, attn_logprob,
     attn_soft, attn_hard, dur_tgt, pitch_tgt) = model_output
    mels = batch["mels"]
    mel_lengths = batch["mel_lengths"]
    input_lengths = batch["input_lengths"]
    T_in = log_dur_pred.shape[1]

    mel_sum, bin_log_sum, hard_sum = fused_masked_sums(
        mel_pred, mels, attn_hard, attn_soft, mel_lengths)

    if use_mel_loss:
        # reference: (l1 * mask).mean() == masked_sum / numel
        mel_loss = mel_sum / float(mel_pred.size)
    else:
        mel_loss = jnp.float32(0.0)

    # duration / pitch: tiny (B, T_in) masked reductions -> plain JAX (perf review)
    il = jnp.minimum(input_lengths.astype(jnp.int32), T_in)
    imask = jnp.arange(T_in)[None, :] < il[:, None]
    mask_sum = jnp.sum(imask.astype(jnp.float32))
    dur_tgt_log = jnp.log(jnp.where(imask, dur_tgt.astype(jnp.float32), 0.0) + 1.0)
    dur_err = jnp.abs(log_dur_pred.astype(jnp.float32) - dur_tgt_log)
    dur_loss = jnp.sum(jnp.where(imask, dur_err, 0.0)) / mask_sum
    pit_err = jnp.abs(pitch_pred.astype(jnp.float32) - pitch_tgt.astype(jnp.float32))
    pitch_loss = jnp.sum(jnp.where(imask, pit_err, 0.0)) / mask_sum

    attn_loss = attention_ctc_loss(attn_logprob, input_lengths, mel_lengths)
    bin_loss = -bin_log_sum / hard_sum
    align_loss = attn_loss + bin_loss

    loss = (mel_scale * mel_loss + dur_scale * dur_loss
            + pitch_scale * pitch_loss + align_scale * align_loss)
    loss_terms = {"mel_loss": mel_loss, "dur_loss": dur_loss,
                  "pitch_loss": pitch_loss, "align_loss": align_loss}
    return loss, loss_terms


if __name__ == "__main__":
    key = jax.random.PRNGKey(0)
    ks = jax.random.split(key, 8)
    B, T_mel, n_mels, T_in = 2, 24, 16, 12

    mel_pred = jax.random.normal(ks[0], (B, T_mel, n_mels), jnp.float32)
    mels = jax.random.normal(ks[1], (B, T_mel, n_mels), jnp.float32)
    log_dur_pred = jax.random.normal(ks[2], (B, T_in), jnp.float32)
    dur_tgt = jax.random.randint(ks[3], (B, T_in), 0, 5).astype(jnp.float32)
    pitch_pred = jax.random.normal(ks[4], (B, T_in), jnp.float32)
    pitch_tgt = jax.random.normal(ks[5], (B, T_in), jnp.float32)
    attn_logprob = jax.random.normal(ks[6], (B, 1, T_mel, T_in), jnp.float32)
    attn_soft = jax.nn.softmax(
        2.0 * jax.random.normal(ks[7], (B, 1, T_mel, T_in), jnp.float32), axis=-1)
    attn_hard = jax.nn.one_hot(jnp.argmax(attn_soft, axis=-1), T_in,
                               dtype=jnp.float32)

    batch = {
        "mels": mels,
        "mel_lengths": jnp.array([24, 18], jnp.int32),
        "input_lengths": jnp.array([12, 9], jnp.int32),
    }
    model_output = (mel_pred, log_dur_pred, pitch_pred, attn_logprob,
                    attn_soft, attn_hard, dur_tgt, pitch_tgt)

    loss, terms = acoustic_model_loss(model_output, batch)
    jax.block_until_ready(loss)
    jax.block_until_ready(terms)
    print("KERNEL_OK")
</pallas_src>

<mosaic_0001>
module attributes {stable_mosaic.version = 11 : i64} {
  func.func @kernel(%arg0: i32, %arg1: i32, %arg2: memref<1x24x16xf32, #tpu.memory_space<vmem>>, %arg3: memref<1x24x16xf32, #tpu.memory_space<vmem>>, %arg4: memref<1x24x12xf32, #tpu.memory_space<vmem>>, %arg5: memref<1x24x12xf32, #tpu.memory_space<vmem>>, %arg6: memref<2xi32, #tpu.memory_space<smem>>, %arg7: memref<1x8x128xf32, #tpu.memory_space<vmem>>) attributes {dimension_semantics = [#tpu.dimension_semantics<parallel>, #tpu.dimension_semantics<arbitrary>], iteration_bounds = array<i64: 2, 1>, scalar_prefetch = 0 : i64, scratch_operands = 0 : i64, tpu.core_type = #tpu.core_type<tc>, window_params = [{transform_indices = @transform_0, window_bounds = array<i64: 1, 24, 16>}, {transform_indices = @transform_1, window_bounds = array<i64: 1, 24, 16>}, {transform_indices = @transform_2, window_bounds = array<i64: 1, 24, 12>}, {transform_indices = @transform_3, window_bounds = array<i64: 1, 24, 12>}, {transform_indices = @transform_4, window_bounds = array<i64: 2>}, {transform_indices = @transform_5, window_bounds = array<i64: 1, 8, 128>}]} {
    %c0_i32 = arith.constant 0 : i32
    %0 = arith.cmpi eq, %arg1, %c0_i32 : i32
    %1 = arith.extui %0 : i1 to i32
    %c0_i32_0 = arith.constant 0 : i32
    %2 = arith.cmpi ne, %1, %c0_i32_0 : i32
    scf.if %2 {
      %cst_34 = arith.constant 0.000000e+00 : f32
      %84 = vector.broadcast %cst_34 : f32 to vector<1x8x128xf32>
      %c0_35 = arith.constant 0 : index
      %c0_36 = arith.constant 0 : index
      %c0_37 = arith.constant 0 : index
      %85 = vector.load %arg7[%c0_35, %c0_36, %c0_37] : memref<1x8x128xf32, #tpu.memory_space<vmem>>, vector<1x8x128xf32>
      tpu.vector_store %arg7[%c0_35, %c0_36, %c0_37], %84 {strides = array<i32>} : memref<1x8x128xf32, #tpu.memory_space<vmem>>, vector<1x8x128xf32>,
    } else {
    }
    %c24_i32 = arith.constant 24 : i32
    %3 = arith.muli %arg1, %c24_i32 : i32
    %4 = arith.index_cast %arg0 : i32 to index
    %5 = memref.load %arg6[%4] : memref<2xi32, #tpu.memory_space<smem>>
    %c24_i32_1 = arith.constant 24 : i32
    %6 = arith.minsi %5, %c24_i32_1 : i32
    %c0 = arith.constant 0 : index
    %c0_2 = arith.constant 0 : index
    %c0_3 = arith.constant 0 : index
    %7 = vector.load %arg2[%c0, %c0_2, %c0_3] : memref<1x24x16xf32, #tpu.memory_space<vmem>>, vector<1x24x16xf32>
    %8 = vector.shape_cast %7 : vector<1x24x16xf32> to vector<24x16xf32>
    %c0_4 = arith.constant 0 : index
    %c0_5 = arith.constant 0 : index
    %c0_6 = arith.constant 0 : index
    %9 = vector.load %arg3[%c0_4, %c0_5, %c0_6] : memref<1x24x16xf32, #tpu.memory_space<vmem>>, vector<1x24x16xf32>
    %10 = vector.shape_cast %9 : vector<1x24x16xf32> to vector<24x16xf32>
    %11 = tpu.iota {dimensions = array<i32: 0>} : vector<24x16xi32>
    %12 = vector.broadcast %3 : i32 to vector<24x16xi32>
    %13 = arith.addi %12, %11 : vector<24x16xi32>
    %14 = vector.broadcast %6 : i32 to vector<24x16xi32>
    %15 = arith.cmpi slt, %13, %14 : vector<24x16xi32>
    %16 = arith.subf %8, %10 : vector<24x16xf32>
    %17 = math.absf %16 : vector<24x16xf32>
    %cst = arith.constant 0.000000e+00 : f32
    %18 = vector.broadcast %cst : f32 to vector<24x16xf32>
    %19 = arith.select %15, %17, %18 : vector<24x16xi1>, vector<24x16xf32>
    %20 = vector.shape_cast %19 : vector<24x16xf32> to vector<1x24x16xf32>
    %cst_7 = arith.constant dense<0.000000e+00> : vector<1xf32>
    %21 = vector.multi_reduction <add>, %20, %cst_7 [1, 2] : vector<1x24x16xf32> to vector<1xf32>
    %22 = vector.shape_cast %21 : vector<1xf32> to vector<1x1x1xf32>
    %23 = vector.extract %22[0, 0, 0] : f32 from vector<1x1x1xf32>
    %c0_8 = arith.constant 0 : index
    %c0_9 = arith.constant 0 : index
    %c0_10 = arith.constant 0 : index
    %24 = vector.load %arg4[%c0_8, %c0_9, %c0_10] : memref<1x24x12xf32, #tpu.memory_space<vmem>>, vector<1x24x12xf32>
    %25 = vector.shape_cast %24 : vector<1x24x12xf32> to vector<24x12xf32>
    %c0_11 = arith.constant 0 : index
    %c0_12 = arith.constant 0 : index
    %c0_13 = arith.constant 0 : index
    %26 = vector.load %arg5[%c0_11, %c0_12, %c0_13] : memref<1x24x12xf32, #tpu.memory_space<vmem>>, vector<1x24x12xf32>
    %27 = vector.shape_cast %26 : vector<1x24x12xf32> to vector<24x12xf32>
    %cst_14 = arith.constant dense<0.000000e+00> : vector<24xf32>
    %28 = vector.multi_reduction <add>, %25, %cst_14 [1] : vector<24x12xf32> to vector<24xf32>
    %29 = vector.shape_cast %28 : vector<24xf32> to vector<24x1xf32>
    %30 = arith.mulf %25, %27 : vector<24x12xf32>
    %cst_15 = arith.constant dense<0.000000e+00> : vector<24xf32>
    %31 = vector.multi_reduction <add>, %30, %cst_15 [1] : vector<24x12xf32> to vector<24xf32>
    %32 = vector.shape_cast %31 : vector<24xf32> to vector<24x1xf32>
    %33 = tpu.iota {dimensions = array<i32: 0>} : vector<24x1xi32>
    %34 = vector.broadcast %3 : i32 to vector<24x1xi32>
    %35 = arith.addi %34, %33 : vector<24x1xi32>
    %c24_i32_16 = arith.constant 24 : i32
    %36 = vector.broadcast %c24_i32_16 : i32 to vector<24x1xi32>
    %37 = arith.cmpi slt, %35, %36 : vector<24x1xi32>
    %cst_17 = arith.constant 5.000000e-01 : f32
    %38 = vector.broadcast %cst_17 : f32 to vector<24x1xf32>
    %39 = arith.cmpf ogt, %29, %38 : vector<24x1xf32>
    %40 = arith.andi %37, %39 : vector<24x1xi1>
    %cst_18 = arith.constant 9.99999996E-13 : f32
    %41 = vector.broadcast %cst_18 : f32 to vector<24x1xf32>
    %42 = arith.maximumf %32, %41 : vector<24x1xf32>
    %43 = math.log %42 : vector<24x1xf32>
    %cst_19 = arith.constant 0.000000e+00 : f32
    %44 = vector.broadcast %cst_19 : f32 to vector<24x1xf32>
    %45 = arith.select %40, %43, %44 : vector<24x1xi1>, vector<24x1xf32>
    %46 = vector.shape_cast %45 : vector<24x1xf32> to vector<1x24x1xf32>
    %cst_20 = arith.constant dense<0.000000e+00> : vector<1xf32>
    %47 = vector.multi_reduction <add>, %46, %cst_20 [1, 2] : vector<1x24x1xf32> to vector<1xf32>
    %48 = vector.shape_cast %47 : vector<1xf32> to vector<1x1x1xf32>
    %49 = vector.extract %48[0, 0, 0] : f32 from vector<1x1x1xf32>
    %cst_21 = arith.constant 0.000000e+00 : f32
    %50 = vector.broadcast %cst_21 : f32 to vector<24x1xf32>
    %51 = arith.select %37, %29, %50 : vector<24x1xi1>, vector<24x1xf32>
    %52 = vector.shape_cast %51 : vector<24x1xf32> to vector<1x24x1xf32>
    %cst_22 = arith.constant dense<0.000000e+00> : vector<1xf32>
    %53 = vector.multi_reduction <add>, %52, %cst_22 [1, 2] : vector<1x24x1xf32> to vector<1xf32>
    %54 = vector.shape_cast %53 : vector<1xf32> to vector<1x1x1xf32>
    %55 = vector.extract %54[0, 0, 0] : f32 from vector<1x1x1xf32>
    %56 = tpu.iota {dimensions = array<i32: 1>} : vector<8x128xi32>
    %57 = tpu.iota {dimensions = array<i32: 0>} : vector<8x128xi32>
    %c0_i32_23 = arith.constant 0 : i32
    %58 = vector.broadcast %c0_i32_23 : i32 to vector<8x128xi32>
    %59 = arith.cmpi eq, %57, %58 : vector<8x128xi32>
    %c0_i32_24 = arith.constant 0 : i32
    %60 = vector.broadcast %c0_i32_24 : i32 to vector<8x128xi32>
    %61 = arith.cmpi eq, %56, %60 : vector<8x128xi32>
    %62 = arith.andi %59, %61 : vector<8x128xi1>
    %cst_25 = arith.constant 0.000000e+00 : f32
    %63 = vector.broadcast %23 : f32 to vector<8x128xf32>
    %64 = vector.broadcast %cst_25 : f32 to vector<8x128xf32>
    %65 = arith.select %62, %63, %64 : vector<8x128xi1>, vector<8x128xf32>
    %c1_i32 = arith.constant 1 : i32
    %66 = vector.broadcast %c1_i32 : i32 to vector<8x128xi32>
    %67 = arith.cmpi eq, %56, %66 : vector<8x128xi32>
    %68 = arith.andi %59, %67 : vector<8x128xi1>
    %cst_26 = arith.constant 0.000000e+00 : f32
    %69 = vector.broadcast %49 : f32 to vector<8x128xf32>
    %70 = vector.broadcast %cst_26 : f32 to vector<8x128xf32>
    %71 = arith.select %68, %69, %70 : vector<8x128xi1>, vector<8x128xf32>
    %72 = arith.addf %65, %71 : vector<8x128xf32>
    %c2_i32 = arith.constant 2 : i32
    %73 = vector.broadcast %c2_i32 : i32 to vector<8x128xi32>
    %74 = arith.cmpi eq, %56, %73 : vector<8x128xi32>
    %75 = arith.andi %59, %74 : vector<8x128xi1>
    %cst_27 = arith.constant 0.000000e+00 : f32
    %76 = vector.broadcast %55 : f32 to vector<8x128xf32>
    %77 = vector.broadcast %cst_27 : f32 to vector<8x128xf32>
    %78 = arith.select %75, %76, %77 : vector<8x128xi1>, vector<8x128xf32>
    %79 = arith.addf %72, %78 : vector<8x128xf32>
    %c0_28 = arith.constant 0 : index
    %c0_29 = arith.constant 0 : index
    %c0_30 = arith.constant 0 : index
    %80 = vector.load %arg7[%c0_28, %c0_29, %c0_30] : memref<1x8x128xf32, #tpu.memory_space<vmem>>, vector<1x8x128xf32>
    %81 = vector.shape_cast %79 : vector<8x128xf32> to vector<1x8x128xf32>
    %82 = arith.addf %80, %81 : vector<1x8x128xf32>
    %c0_31 = arith.constant 0 : index
    %c0_32 = arith.constant 0 : index
    %c0_33 = arith.constant 0 : index
    %83 = vector.load %arg7[%c0_31, %c0_32, %c0_33] : memref<1x8x128xf32, #tpu.memory_space<vmem>>, vector<1x8x128xf32>
    tpu.vector_store %arg7[%c0_31, %c0_32, %c0_33], %82 {strides = array<i32>} : memref<1x8x128xf32, #tpu.memory_space<vmem>>, vector<1x8x128xf32>,
    return
  }
  func.func @transform_0(%arg0: i32, %arg1: i32) -> (i32, i32, i32) {
    %c0_i32 = arith.constant 0 : i32
    %c0_i32_0 = arith.constant 0 : i32
    return %arg0, %arg1, %c0_i32 : i32, i32, i32
  }
  func.func @transform_1(%arg0: i32, %arg1: i32) -> (i32, i32, i32) {
    %c0_i32 = arith.constant 0 : i32
    %c0_i32_0 = arith.constant 0 : i32
    return %arg0, %arg1, %c0_i32 : i32, i32, i32
  }
  func.func @transform_2(%arg0: i32, %arg1: i32) -> (i32, i32, i32) {
    %c0_i32 = arith.constant 0 : i32
    %c0_i32_0 = arith.constant 0 : i32
    return %arg0, %arg1, %c0_i32 : i32, i32, i32
  }
  func.func @transform_3(%arg0: i32, %arg1: i32) -> (i32, i32, i32) {
    %c0_i32 = arith.constant 0 : i32
    %c0_i32_0 = arith.constant 0 : i32
    return %arg0, %arg1, %c0_i32 : i32, i32, i32
  }
  func.func @transform_4(%arg0: i32, %arg1: i32) -> i32 {
    %c0_i32 = arith.constant 0 : i32
    %c0_i32_0 = arith.constant 0 : i32
    return %c0_i32 : i32
  }
  func.func @transform_5(%arg0: i32, %arg1: i32) -> (i32, i32, i32) {
    %c0_i32 = arith.constant 0 : i32
    %c0_i32_0 = arith.constant 0 : i32
    %c0_i32_1 = arith.constant 0 : i32
    return %arg0, %c0_i32, %c0_i32_0 : i32, i32, i32
  }
}

</mosaic_0001>

<llo_original>
// kernel: tpu_custom_call.1
$region0: #{tpu_custom_call.1}
  #allocation0 [shape = 'u32[]', space=smem, size = 0x4, offset = 0x4, fixed_abs, tag = 'smem constant byte address 0x4 - core index']
  #allocation1 [shape = 'u32[144,128]{1,0:T(1,128)}', space=vmem, size = 0x12000, scoped, tag = 'internal scratch']
  %s0 = inlined_call_operand.vmem [shape: f32[2,24,16], index: 0, kind: input, shape index: {}]
  %s1 = inlined_call_operand.vmem [shape: f32[2,24,16], index: 1, kind: input, shape index: {}]
  %s2 = inlined_call_operand.vmem [shape: f32[2,24,12], index: 2, kind: input, shape index: {}]
  %s3 = inlined_call_operand.vmem [shape: f32[2,24,12], index: 3, kind: input, shape index: {}]
  %s4 = inlined_call_operand.vmem [shape: s32[2], index: 4, kind: input, shape index: {}]
  %s5 = inlined_call_operand.hbm [shape: f32[2,8,128], index: 5, kind: output, shape index: {}]
  %s6 = sld [smem:[#allocation0]]
  $region61: #{tpu_custom_call.1} parent=0
    _
  %s8 = ssub.s32 1, %s6
  %s9 = scalar_select 0, %s8, %s6
  $region1: #{tpu_custom_call.1} parent=0
    #allocation2 [shape = 'u8[512]{0}', space=smem, size = 0x200, scoped, tag = 'input window, operand 4, single buffered']
    #allocation3 [shape = 's32[2]{0}', space=sflag, size = 0x8, scoped, tag = 'scoped memory for tpu_custom_call.1']
    #allocation4 [shape = 's32[2]{0}', space=sflag, size = 0x8, scoped, tag = 'scoped memory for tpu_custom_call.1']
    #allocation5 [shape = 'u8[8192]{0}', space=vmem, size = 0x2000, scoped, tag = 'output window, operand 0']
    %10 = vsyncpa [#allocation4], 0
    %11 = vsyncpa [#allocation3], 0
    %s12 = scalar_lea.sflag [#allocation3], 1
    %13 = vsyncpa %s12, 0
    loop: start=0, step=1, limit=4
    $region2: #{tpu_custom_call.1} parent=1 // loop_pre_header
      _
    $region3: #{tpu_custom_call.1} parent=1 // loop_header
      %s15 = sphi 0, %s19
      %p16 = scmp.ge.s32.totalorder %s15, 4
      %s22 = sphi 0, %s34
      %s23 = sphi 0, %s30
      %s24 = sphi 0, %s22
      %s25 = sphi 0, %s23
      %s26 = sphi 0, %s24
      %s27 = sphi 0, %s25
      %s39 = sphi 0, %s41
      %s42 = sphi 0, %s39
      %s43 = sphi 0, %s42
      %s59 = sphi 0, %s43
      %s67 = sphi 0, %s69
      %s70 = sphi 0, %s67
      %s71 = sphi 0, %s70
      %s87 = sphi 0, %s71
      %s95 = sphi 0, %s97
      %s98 = sphi 0, %s95
      %s99 = sphi 0, %s98
      %s115 = sphi 0, %s99
      %s123 = sphi 0, %s125
      %s126 = sphi 0, %s123
      %s127 = sphi 0, %s126
      %s143 = sphi 0, %s127
      %s147 = sphi 0, %s147
      %s149 = sphi 0, %s147
      %s150 = sphi 0, %s149
      %s164 = sphi 0, %s150
      %s170 = sphi 0, %s172
      %s173 = sphi 0, %s170
      %s174 = sphi 0, %s173
      %s190 = sphi 0, %s174
    $region4: #{tpu_custom_call.1} parent=1 // loop_header_branch
      %18 = sbr.rel (%p16) target = $region8
    $region5: #{tpu_custom_call.1} parent=1 // loop_body
      %s20 = ssub.s32 %s15, 1
      %s21 = ssub.s32 %s15, 2
      %s28 = sadd.s32 1, %s23
      %p29 = scmp.ge.s32.totalorder %s28, 1
      %s30 = scalar_select %p29, 0, %s28
      %s31 = sadd.s32 1, %s22
      %s32 = scalar_select %p29, %s31, %s22
      %p33 = scmp.ge.s32.totalorder %s32, 2
      %s34 = scalar_select %p33, 0, %s32
      %s35 = ssub.s32 %s22, %s34
      %s36 = ssub.s32 %s23, %s30
      %s37 = sor.u32 %s35, %s36
      %p38 = scmp.eq.s32.totalorder %s37, 0
      %s40 = sadd.s32 %s39, 1
      %s41 = scalar_select %p38, %s39, %s40
      %p44 = pneg %p38
      %p45 = scmp.eq.s32.totalorder %s15, 1
      %p46 = por %p44, %p45
      %p47 = scmp.ne.s32.totalorder %s39, %s42
      %p48 = scmp.eq.s32.totalorder %s15, 0
      %p49 = por %p47, %p48
      %p50 = scmp.ne.s32.totalorder %s39, %s42
      %p51 = scmp.eq.s32.totalorder %s20, 1
      %p52 = por %p50, %p51
      %p53 = scmp.ne.s32.totalorder %s42, %s43
      %p54 = scmp.eq.s32.totalorder %s20, 0
      %p55 = por %p53, %p54
      %p56 = scmp.ne.s32.totalorder %s42, %s43
      %p57 = scmp.eq.s32.totalorder %s21, 1
      %p58 = por %p56, %p57
      %p60 = scmp.ne.s32.totalorder %s43, %s59
      %p61 = scmp.eq.s32.totalorder %s21, 0
      %p62 = por %p60, %p61
      %s63 = ssub.s32 %s22, %s34
      %s64 = ssub.s32 %s23, %s30
      %s65 = sor.u32 %s63, %s64
      %p66 = scmp.eq.s32.totalorder %s65, 0
      %s68 = sadd.s32 %s67, 1
      %s69 = scalar_select %p66, %s67, %s68
      %p72 = pneg %p66
      %p73 = scmp.eq.s32.totalorder %s15, 1
      %p74 = por %p72, %p73
      %p75 = scmp.ne.s32.totalorder %s67, %s70
      %p76 = scmp.eq.s32.totalorder %s15, 0
      %p77 = por %p75, %p76
      %p78 = scmp.ne.s32.totalorder %s67, %s70
      %p79 = scmp.eq.s32.totalorder %s20, 1
      %p80 = por %p78, %p79
      %p81 = scmp.ne.s32.totalorder %s70, %s71
      %p82 = scmp.eq.s32.totalorder %s20, 0
      %p83 = por %p81, %p82
      %p84 = scmp.ne.s32.totalorder %s70, %s71
      %p85 = scmp.eq.s32.totalorder %s21, 1
      %p86 = por %p84, %p85
      %p88 = scmp.ne.s32.totalorder %s71, %s87
      %p89 = scmp.eq.s32.totalorder %s21, 0
      %p90 = por %p88, %p89
      %s91 = ssub.s32 %s22, %s34
      %s92 = ssub.s32 %s23, %s30
      %s93 = sor.u32 %s91, %s92
      %p94 = scmp.eq.s32.totalorder %s93, 0
      %s96 = sadd.s32 %s95, 1
      %s97 = scalar_select %p94, %s95, %s96
      %p100 = pneg %p94
      %p101 = scmp.eq.s32.totalorder %s15, 1
      %p102 = por %p100, %p101
      %p103 = scmp.ne.s32.totalorder %s95, %s98
      %p104 = scmp.eq.s32.totalorder %s15, 0
      %p105 = por %p103, %p104
      %p106 = scmp.ne.s32.totalorder %s95, %s98
      %p107 = scmp.eq.s32.totalorder %s20, 1
      %p108 = por %p106, %p107
      %p109 = scmp.ne.s32.totalorder %s98, %s99
      %p110 = scmp.eq.s32.totalorder %s20, 0
      %p111 = por %p109, %p110
      %p112 = scmp.ne.s32.totalorder %s98, %s99
      %p113 = scmp.eq.s32.totalorder %s21, 1
      %p114 = por %p112, %p113
      %p116 = scmp.ne.s32.totalorder %s99, %s115
      %p117 = scmp.eq.s32.totalorder %s21, 0
      %p118 = por %p116, %p117
      %s119 = ssub.s32 %s22, %s34
      %s120 = ssub.s32 %s23, %s30
      %s121 = sor.u32 %s119, %s120
      %p122 = scmp.eq.s32.totalorder %s121, 0
      %s124 = sadd.s32 %s123, 1
      %s125 = scalar_select %p122, %s123, %s124
      %p128 = pneg %p122
      %p129 = scmp.eq.s32.totalorder %s15, 1
      %p130 = por %p128, %p129
      %p131 = scmp.ne.s32.totalorder %s123, %s126
      %p132 = scmp.eq.s32.totalorder %s15, 0
      %p133 = por %p131, %p132
      %p134 = scmp.ne.s32.totalorder %s123, %s126
      %p135 = scmp.eq.s32.totalorder %s20, 1
      %p136 = por %p134, %p135
      %p137 = scmp.ne.s32.totalorder %s126, %s127
      %p138 = scmp.eq.s32.totalorder %s20, 0
      %p139 = por %p137, %p138
      %p140 = scmp.ne.s32.totalorder %s126, %s127
      %p141 = scmp.eq.s32.totalorder %s21, 1
      %p142 = por %p140, %p141
      %p144 = scmp.ne.s32.totalorder %s127, %s143
      %p145 = scmp.eq.s32.totalorder %s21, 0
      %p146 = por %p144, %p145
      %s148 = sadd.s32 %s147, 1
      %p151 = scmp.eq.s32.totalorder %s15, 1
      %p152 = scmp.ne.s32.totalorder %s147, %s149
      %p153 = scmp.eq.s32.totalorder %s15, 0
      %p154 = por %p152, %p153
      %p155 = scmp.ne.s32.totalorder %s147, %s149
      %p156 = scmp.eq.s32.totalorder %s20, 1
      %p157 = por %p155, %p156
      %p158 = scmp.ne.s32.totalorder %s149, %s150
      %p159 = scmp.eq.s32.totalorder %s20, 0
      %p160 = por %p158, %p159
      %p161 = scmp.ne.s32.totalorder %s149, %s150
      %p162 = scmp.eq.s32.totalorder %s21, 1
      %p163 = por %p161, %p162
      %p165 = scmp.ne.s32.totalorder %s150, %s164
      %p166 = scmp.eq.s32.totalorder %s21, 0
      %p167 = por %p165, %p166
      %s168 = ssub.s32 %s22, %s34
      %p169 = scmp.eq.s32.totalorder %s168, 0
      %s171 = sadd.s32 %s170, 1
      %s172 = scalar_select %p169, %s170, %s171
      %p175 = pneg %p169
      %p176 = scmp.eq.s32.totalorder %s15, 1
      %p177 = por %p175, %p176
      %p178 = scmp.ne.s32.totalorder %s170, %s173
      %p179 = scmp.eq.s32.totalorder %s15, 0
      %p180 = por %p178, %p179
      %p181 = scmp.ne.s32.totalorder %s170, %s173
      %p182 = scmp.eq.s32.totalorder %s20, 1
      %p183 = por %p181, %p182
      %p184 = scmp.ne.s32.totalorder %s173, %s174
      %p185 = scmp.eq.s32.totalorder %s20, 0
      %p186 = por %p184, %p185
      %p187 = scmp.ne.s32.totalorder %s173, %s174
      %p188 = scmp.eq.s32.totalorder %s21, 1
      %p189 = por %p187, %p188
      %p191 = scmp.ne.s32.totalorder %s174, %s190
      %p192 = scmp.eq.s32.totalorder %s21, 0
      %p193 = por %p191, %p192
      %p194 = scmp.le.s32.totalorder 1, %s15
      %p195 = scmp.lt.s32.totalorder %s15, 3
      %p196 = pnand %p194, %p195
      %p197 = pneg %p196
      // Predicated region
      $region9: #{tpu_custom_call.1} parent=5 // pred_check
        _
      $region10: #{tpu_custom_call.1} parent=5 // pred_check_branch
        %199 = sbr.rel (%p196) target = $region12
      $region11: #{tpu_custom_call.1} parent=5 // pred_region
        %s200 = ssub.s32 %s15, 1
        // Predicated region
        $region13: #{tpu_custom_call.1} parent=11 // pred_check
          %p201 = pneg %p160
        $region14: #{tpu_custom_call.1} parent=11 // pred_check_branch
          %203 = sbr.rel (%p201) target = $region16
        $region15: #{tpu_custom_call.1} parent=11 // pred_region
          %s205 = ssub.s32 16, 16
          %206 = vsyncadd [#allocation4], %s205
          %s208 = sshll.u32 %s4, 4
          %s209 = int_to_ptr.vmem [resolvable:$true] %s208
          %211 = dma.vmem_to_smem %s209, 16, [#allocation2], [#allocation4]
        $region16: #{tpu_custom_call.1} parent=11 // pred_fallthru
          _
      $region12: #{tpu_custom_call.1} parent=5 // pred_fallthru
        _
      %p212 = scmp.lt.s32.totalorder %s15, 2
      // Predicated region
      $region17: #{tpu_custom_call.1} parent=5 // pred_check
        %p213 = pneg %p212
      $region18: #{tpu_custom_call.1} parent=5 // pred_check_branch
        %215 = sbr.rel (%p213) target = $region20
      $region19: #{tpu_custom_call.1} parent=5 // pred_region
        // Predicated region
        $region21: #{tpu_custom_call.1} parent=19 // pred_check
          %p216 = pneg %p49
        $region22: #{tpu_custom_call.1} parent=19 // pred_check_branch
          %218 = sbr.rel (%p216) target = $region24
        $region23: #{tpu_custom_call.1} parent=19 // pred_region
          %s219 = smul.u32 3, %s23
          %p220 = scmp.lt.s32.totalorder %s22, 1
          %s221 = scalar_select %p220, %s22, 1
          %p222 = scmp.lt.s32.totalorder %s219, 2
          %s223 = scalar_select %p222, %s219, 2
          %s224 = smul.addr %s221, 3
          %s225 = sadd.s32 %s223, %s224
          %s226 = smul.addr %s225, 8
          %s227 = scalar_lea.vmem %s0, %s226
          %s228 = smul.u32 3, %s23
        $region24: #{tpu_custom_call.1} parent=19 // pred_fallthru
          _
        // Predicated region
        $region25: #{tpu_custom_call.1} parent=19 // pred_check
          %p229 = pneg %p77
        $region26: #{tpu_custom_call.1} parent=19 // pred_check_branch
          %231 = sbr.rel (%p229) target = $region28
        $region27: #{tpu_custom_call.1} parent=19 // pred_region
          %s232 = smul.u32 3, %s23
          %p233 = scmp.lt.s32.totalorder %s22, 1
          %s234 = scalar_select %p233, %s22, 1
          %p235 = scmp.lt.s32.totalorder %s232, 2
          %s236 = scalar_select %p235, %s232, 2
          %s237 = smul.addr %s234, 3
          %s238 = sadd.s32 %s236, %s237
          %s239 = smul.addr %s238, 8
          %s240 = scalar_lea.vmem %s1, %s239
          %s241 = smul.u32 3, %s23
        $region28: #{tpu_custom_call.1} parent=19 // pred_fallthru
          _
        // Predicated region
        $region29: #{tpu_custom_call.1} parent=19 // pred_check
          %p242 = pneg %p105
        $region30: #{tpu_custom_call.1} parent=19 // pred_check_branch
          %244 = sbr.rel (%p242) target = $region32
        $region31: #{tpu_custom_call.1} parent=19 // pred_region
          %s245 = smul.u32 3, %s23
          %p246 = scmp.lt.s32.totalorder %s22, 1
          %s247 = scalar_select %p246, %s22, 1
          %p248 = scmp.lt.s32.totalorder %s245, 2
          %s249 = scalar_select %p248, %s245, 2
          %s250 = smul.addr %s247, 3
          %s251 = sadd.s32 %s249, %s250
          %s252 = smul.addr %s251, 8
          %s253 = scalar_lea.vmem %s2, %s252
          %s254 = smul.u32 3, %s23
        $region32: #{tpu_custom_call.1} parent=19 // pred_fallthru
          _
        // Predicated region
        $region33: #{tpu_custom_call.1} parent=19 // pred_check
          %p255 = pneg %p133
        $region34: #{tpu_custom_call.1} parent=19 // pred_check_branch
          %257 = sbr.rel (%p255) target = $region36
        $region35: #{tpu_custom_call.1} parent=19 // pred_region
          %s258 = smul.u32 3, %s23
          %p259 = scmp.lt.s32.totalorder %s22, 1
          %s260 = scalar_select %p259, %s22, 1
          %p261 = scmp.lt.s32.totalorder %s258, 2
          %s262 = scalar_select %p261, %s258, 2
          %s263 = smul.addr %s260, 3
          %s264 = sadd.s32 %s262, %s263
          %s265 = smul.addr %s264, 8
          %s266 = scalar_lea.vmem %s3, %s265
          %s267 = smul.u32 3, %s23
        $region36: #{tpu_custom_call.1} parent=19 // pred_fallthru
          _
      $region20: #{tpu_custom_call.1} parent=5 // pred_fallthru
        _
      %p268 = scmp.le.s32.totalorder 1, %s15
      %p269 = scmp.lt.s32.totalorder %s15, 3
      %p270 = pnand %p268, %p269
      %p271 = pneg %p270
      // Predicated region
      $region37: #{tpu_custom_call.1} parent=5 // pred_check
        _
      $region38: #{tpu_custom_call.1} parent=5 // pred_check_branch
        %273 = sbr.rel (%p270) target = $region40
      $region39: #{tpu_custom_call.1} parent=5 // pred_region
        %s274 = ssub.s32 %s15, 1
        // Predicated region
        $region41: #{tpu_custom_call.1} parent=39 // pred_check
          %p275 = pneg %p160
        $region42: #{tpu_custom_call.1} parent=39 // pred_check_branch
          %277 = sbr.rel (%p275) target = $region44
        $region43: #{tpu_custom_call.1} parent=39 // pred_region
          %278 = dma.done [#allocation4], 16
        $region44: #{tpu_custom_call.1} parent=39 // pred_fallthru
          _
        %279 = sfence
        %s280 = smul.u32 3, %s25
        %p281 = scmp.lt.s32.totalorder %s24, 1
        %s282 = scalar_select %p281, %s24, 1
        %p283 = scmp.lt.s32.totalorder %s280, 2
        %s284 = scalar_select %p283, %s280, 2
        %s285 = smul.addr %s282, 3
        %s286 = sadd.s32 %s284, %s285
        %s287 = smul.addr %s286, 8
        %s288 = scalar_lea.vmem %s0, %s287
        %p289 = pneg %p55
        %p290 = pneg %p52
        %s291 = smul.u32 3, %s25
        %p292 = scmp.lt.s32.totalorder %s24, 1
        %s293 = scalar_select %p292, %s24, 1
        %p294 = scmp.lt.s32.totalorder %s291, 2
        %s295 = scalar_select %p294, %s291, 2
        %s296 = smul.addr %s293, 3
        %s297 = sadd.s32 %s295, %s296
        %s298 = smul.addr %s297, 8
        %s299 = scalar_lea.vmem %s1, %s298
        %p300 = pneg %p83
        %p301 = pneg %p80
        %s302 = smul.u32 3, %s25
        %p303 = scmp.lt.s32.totalorder %s24, 1
        %s304 = scalar_select %p303, %s24, 1
        %p305 = scmp.lt.s32.totalorder %s302, 2
        %s306 = scalar_select %p305, %s302, 2
        %s307 = smul.addr %s304, 3
        %s308 = sadd.s32 %s306, %s307
        %s309 = smul.addr %s308, 8
        %s310 = scalar_lea.vmem %s2, %s309
        %p311 = pneg %p111
        %p312 = pneg %p108
        %s313 = smul.u32 3, %s25
        %p314 = scmp.lt.s32.totalorder %s24, 1
        %s315 = scalar_select %p314, %s24, 1
        %p316 = scmp.lt.s32.totalorder %s313, 2
        %s317 = scalar_select %p316, %s313, 2
        %s318 = smul.addr %s315, 3
        %s319 = sadd.s32 %s317, %s318
        %s320 = smul.addr %s319, 8
        %s321 = scalar_lea.vmem %s3, %s320
        %p322 = pneg %p139
        %p323 = pneg %p136
        %p324 = pneg %p160
        %p325 = pneg %p157
        %p326 = pneg %p186
        %p327 = pneg %p183
        %s328 = sand.u32 %s173, 1
        %s329 = scalar_lea.sflag [#allocation3], %s328
        %s330 = sand.u32 %s173, 1
        %s331 = smul.addr %s330, 8
        %s332 = scalar_lea.vmem [#allocation5], %s331
        %s333 = smul.u32 3, %s25
        %p334 = scmp.lt.s32.totalorder %s24, 1
        %s335 = scalar_select %p334, %s24, 1
        %p336 = scmp.lt.s32.totalorder %s333, 2
        %s337 = scalar_select %p336, %s333, 2
        %s338 = smul.addr %s335, 3
        %s339 = sadd.s32 %s337, %s338
        %s340 = smul.addr %s339, 8
        %s341 = scalar_lea.vmem %s0, %s340
        %s342 = smul.u32 3, %s25
        %s343 = smul.u32 3, %s25
        %p344 = scmp.lt.s32.totalorder %s24, 1
        %s345 = scalar_select %p344, %s24, 1
        %p346 = scmp.lt.s32.totalorder %s343, 2
        %s347 = scalar_select %p346, %s343, 2
        %s348 = smul.addr %s345, 3
        %s349 = sadd.s32 %s347, %s348
        %s350 = smul.addr %s349, 8
        %s351 = scalar_lea.vmem %s1, %s350
        %s352 = smul.u32 3, %s25
        %s353 = smul.u32 3, %s25
        %p354 = scmp.lt.s32.totalorder %s24, 1
        %s355 = scalar_select %p354, %s24, 1
        %p356 = scmp.lt.s32.totalorder %s353, 2
        %s357 = scalar_select %p356, %s353, 2
        %s358 = smul.addr %s355, 3
        %s359 = sadd.s32 %s357, %s358
        %s360 = smul.addr %s359, 8
        %s361 = scalar_lea.vmem %s2, %s360
        %s362 = smul.u32 3, %s25
        %s363 = smul.u32 3, %s25
        %p364 = scmp.lt.s32.totalorder %s24, 1
        %s365 = scalar_select %p364, %s24, 1
        %p366 = scmp.lt.s32.totalorder %s363, 2
        %s367 = scalar_select %p366, %s363, 2
        %s368 = smul.addr %s365, 3
        %s369 = sadd.s32 %s367, %s368
        %s370 = smul.addr %s369, 8
        %s371 = scalar_lea.vmem %s3, %s370
        %s372 = smul.u32 3, %s25
        %p373 = scmp.eq.s32.totalorder %s25, 0
        // Predicated region
        $region45: #{tpu_custom_call.1} parent=39 // pred_check
          %p374 = pneg %p373
        $region46: #{tpu_custom_call.1} parent=39 // pred_check_branch
          %376 = sbr.rel (%p374) target = $region48
        $region47: #{tpu_custom_call.1} parent=39 // pred_region
          %377 = vst [vmem:[%s332] sm:$0xff] 0.0
        $region48: #{tpu_custom_call.1} parent=39 // pred_fallthru
          _
        %s378 = smul.u32 %s25, 24
        %s379 = sld [smem:[#allocation2 + %s24]]
        %p380 = scmp.lt.s32.totalorder %s379, 24
        %s381 = scalar_select %p380, %s379, 24
        %v382 = vld [vmem:[%s341] sm:$0xff]
        %v383 = vld [vmem:[%s341 + $0x8] sm:$0xff]
        %v384 = vld [vmem:[%s341 + $0x10] sm:$0xff]
        %v385 = vld [vmem:[%s351] sm:$0xff]
        %v386 = vld [vmem:[%s351 + $0x8] sm:$0xff]
        %v387 = vld [vmem:[%s351 + $0x10] sm:$0xff]
        %v388 = vlaneseq
        %v389 = vshrl.u32 %v388, 7
        %v390 = vadd.s32 %v389, 8
        %v391 = vadd.s32 %v389, 16
        %v392 = vstv %s378
        %v393 = vadd.s32 %v392, %v389
        %v394 = vadd.s32 %v392, %v390
        %v395 = vadd.s32 %v392, %v391
        %v396 = vstv %s381
        %vm397 = vcmp.lt.s32.totalorder %v393, %v396
        %vm398 = vcmp.lt.s32.totalorder %v394, %v396
        %vm399 = vcmp.lt.s32.totalorder %v395, %v396
        %v400 = vsub.f32 %v382, %v385
        %v401 = vsub.f32 %v383, %v386
        %v402 = vsub.f32 %v384, %v387
        %v403 = vand.u32 2147483647, %v400
        %v404 = vand.u32 2147483647, %v401
        %v405 = vand.u32 2147483647, %v402
        %v406 = vsel %vm397, %v403, 0.0
        %v407 = vsel %vm398, %v404, 0.0
        %v408 = vsel %vm399, %v405, 0.0
        %vm409 = vcmask 130048
        %v410 = vsel %vm409, %v406, 0.0
        %v411 = vsel %vm409, %v407, 0.0
        %v412 = vadd.f32 %v410, %v411
        %v413 = vsel %vm409, %v408, 0.0
        %v414 = vadd.f32 %v412, %v413
        %415 = vadd.xlane.f32.xlu0 %v414
        %v416 = vpop.xlane.xlu0 %415
        %v417 = vrot.slane %v416, 4
        %v418 = vadd.f32 %v416, %v417
        %v419 = vrot.slane %v418, 2
        %v420 = vadd.f32 %v418, %v419
        %v421 = vrot.slane %v420, 1
        %v422 = vadd.f32 %v420, %v421
        %s423 = vtos %v422
        %v424 = vld [vmem:[%s361] sm:$0xff]
        %v425 = vld [vmem:[%s361 + $0x8] sm:$0xff]
        %v426 = vld [vmem:[%s361 + $0x10] sm:$0xff]
        %v427 = vld [vmem:[%s371] sm:$0xff]
        %v428 = vld [vmem:[%s371 + $0x8] sm:$0xff]
        %v429 = vld [vmem:[%s371 + $0x10] sm:$0xff]
        %vm430 = vcmask 97280
        %v431 = vsel %vm430, %v424, 0.0
        %432 = vadd.xlane.f32.xlu0 %v431
        %v433 = vpop.xlane.xlu0 %432
        %v434 = vsel %vm430, %v425, 0.0
        %435 = vadd.xlane.f32.xlu0 %v434
        %v436 = vpop.xlane.xlu0 %435
        %v437 = vsel %vm430, %v426, 0.0
        %438 = vadd.xlane.f32.xlu0 %v437
        %v439 = vpop.xlane.xlu0 %438
        %v440 = vmul.f32 %v424, %v427
        %v441 = vmul.f32 %v425, %v428
        %v442 = vmul.f32 %v426, %v429
        %v443 = vsel %vm430, %v440, 0.0
        %444 = vadd.xlane.f32.xlu0 %v443
        %v445 = vpop.xlane.xlu0 %444
        %v446 = vsel %vm430, %v441, 0.0
        %447 = vadd.xlane.f32.xlu0 %v446
        %v448 = vpop.xlane.xlu0 %447
        %v449 = vsel %vm430, %v442, 0.0
        %450 = vadd.xlane.f32.xlu0 %v449
        %v451 = vpop.xlane.xlu0 %450
        %vm452 = vcmp.lt.s32.totalorder %v393, 24
        %vm453 = vcmp.lt.s32.totalorder %v394, 24
        %vm454 = vcmp.lt.s32.totalorder %v395, 24
        %vm455 = vcmp.gt.f32.partialorder %v433, 0.5
        %vm456 = vcmp.gt.f32.partialorder %v436, 0.5
        %vm457 = vcmp.gt.f32.partialorder %v439, 0.5
        %vm458 = vmand %vm452, %vm455
        %vm459 = vmand %vm453, %vm456
        %vm460 = vmand %vm454, %vm457
        %v461 = vmax.f32 %v445, 1e-12
        %v462 = vmax.f32 %v448, 1e-12
        %v463 = vmax.f32 %v451, 1e-12
        %v464 = vlog2.pop %v461
        %v465 = vmul.f32 %v464, 0.6931472
        %v466 = vlog2.pop %v462
        %v467 = vmul.f32 %v466, 0.6931472
        %v468 = vlog2.pop %v463
        %v469 = vmul.f32 %v468, 0.6931472
        %v470 = vsel %vm458, %v465, 0.0
        %v471 = vsel %vm459, %v467, 0.0
        %v472 = vsel %vm460, %v469, 0.0
        %vm473 = vcmask 7168
        %v474 = vsel %vm473, %v470, 0.0
        %v475 = vsel %vm473, %v471, 0.0
        %v476 = vadd.f32 %v474, %v475
        %v477 = vsel %vm473, %v472, 0.0
        %v478 = vadd.f32 %v476, %v477
        %479 = vadd.xlane.f32.xlu0 %v478
        %v480 = vpop.xlane.xlu0 %479
        %v481 = vrot.slane %v480, 4
        %v482 = vadd.f32 %v480, %v481
        %v483 = vrot.slane %v482, 2
        %v484 = vadd.f32 %v482, %v483
        %v485 = vrot.slane %v484, 1
        %v486 = vadd.f32 %v484, %v485
        %s487 = vtos %v486
        %v488 = vsel %vm452, %v433, 0.0
        %v489 = vsel %vm453, %v436, 0.0
        %v490 = vsel %vm454, %v439, 0.0
        %v491 = vsel %vm473, %v488, 0.0
        %v492 = vsel %vm473, %v489, 0.0
        %v493 = vadd.f32 %v491, %v492
        %v494 = vsel %vm473, %v490, 0.0
        %v495 = vadd.f32 %v493, %v494
        %496 = vadd.xlane.f32.xlu0 %v495
        %v497 = vpop.xlane.xlu0 %496
        %v498 = vrot.slane %v497, 4
        %v499 = vadd.f32 %v497, %v498
        %v500 = vrot.slane %v499, 2
        %v501 = vadd.f32 %v499, %v500
        %v502 = vrot.slane %v501, 1
        %v503 = vadd.f32 %v501, %v502
        %s504 = vtos %v503
        %v505 = vlaneseq
        %v506 = vand.u32 %v505, 127
        %vm507 = vcmp.eq.s32.totalorder %v389, 0
        %vm508 = vcmp.eq.s32.totalorder %v506, 0
        %vm509 = vmand %vm507, %vm508
        %v510 = vstv %s423
        %v511 = vsel %vm509, %v510, 0.0
        %vm512 = vcmp.eq.s32.totalorder %v506, 1
        %vm513 = vmand %vm507, %vm512
        %v514 = vstv %s487
        %v515 = vsel %vm513, %v514, 0.0
        %v516 = vadd.f32 %v511, %v515
        %vm517 = vcmp.eq.s32.totalorder %v506, 2
        %vm518 = vmand %vm507, %vm517
        %v519 = vstv %s504
        %v520 = vsel %vm518, %v519, 0.0
        %v521 = vadd.f32 %v516, %v520
        %v522 = vld [vmem:[%s332] sm:$0xff]
        %v523 = vadd.f32 %v522, %v521
        %524 = vst [vmem:[%s332] sm:$0xff] %v523
        %s525 = sand.u32 %s173, 1
        %s526 = scalar_lea.sflag [#allocation3], %s525
        %s527 = sand.u32 %s173, 1
        %s528 = smul.addr %s527, 8
        %s529 = scalar_lea.vmem [#allocation5], %s528
        // Predicated region
        $region49: #{tpu_custom_call.1} parent=39 // pred_check
          %p530 = pneg %p183
        $region50: #{tpu_custom_call.1} parent=39 // pred_check_branch
          %532 = sbr.rel (%p530) target = $region52
        $region51: #{tpu_custom_call.1} parent=39 // pred_region
          %s534 = ssub.s32 128, 128
          %535 = vsyncadd %s526, %s534
          %s536 = smul.addr %s24, 128
          %s537 = scalar_lea.hbm %s5, %s536
          %s539 = sshll.u32 %s529, 4
          %s540 = int_to_ptr.vmem [resolvable:$true] %s539
          %542 = dma.vmem_to_hbm [thread:$0]  %s540, 128, %s537, %s526
        $region52: #{tpu_custom_call.1} parent=39 // pred_fallthru
          _
      $region40: #{tpu_custom_call.1} parent=5 // pred_fallthru
        _
      %p543 = scmp.le.s32.totalorder 2, %s15
      // Predicated region
      $region53: #{tpu_custom_call.1} parent=5 // pred_check
        %p544 = pneg %p543
      $region54: #{tpu_custom_call.1} parent=5 // pred_check_branch
        %546 = sbr.rel (%p544) target = $region56
      $region55: #{tpu_custom_call.1} parent=5 // pred_region
        %s547 = ssub.s32 %s15, 2
        // Predicated region
        $region57: #{tpu_custom_call.1} parent=55 // pred_check
          %p548 = pneg %p189
        $region58: #{tpu_custom_call.1} parent=55 // pred_check_branch
          %550 = sbr.rel (%p548) target = $region60
        $region59: #{tpu_custom_call.1} parent=55 // pred_region
          %s551 = sand.u32 %s174, 1
          %s552 = scalar_lea.sflag [#allocation3], %s551
          %s553 = sand.u32 %s174, 1
          %s554 = smul.addr %s553, 8
          %s555 = scalar_lea.vmem [#allocation5], %s554
          %556 = dma.done %s552, 128
        $region60: #{tpu_custom_call.1} parent=55 // pred_fallthru
          _
      $region56: #{tpu_custom_call.1} parent=5 // pred_fallthru
        _
    $region6: #{tpu_custom_call.1} parent=1 // loop_footer
      %s19 = sadd.s32 1, %s15
    $region7: #{tpu_custom_call.1} parent=1 // loop_footer_branch
      %14 = sbr.rel target = $region3
    $region8: #{tpu_custom_call.1} parent=1 // loop_exit
      _
    %557 = vsyncpa [#allocation3], 1
    %s558 = scalar_lea.sflag [#allocation3], 1
    %559 = vsyncpa %s558, 1
    %560 = vsyncpa [#allocation4], 1
    %s561 = scalar_lea.sflag [#allocation4], 1
    %562 = vsyncpa %s561, 1

</llo_original>
